<compile_context>
chip_gen: v7x
topology: tpu7x:2x2x1
jax: 0.10.0
libtpu: 0.0.40
codegen_flags: <defaults>
</compile_context>

<pallas_src>
import functools

import jax
import jax.numpy as jnp
from jax.experimental import pallas as pl
from jax.experimental.pallas import tpu as pltpu

LANE = 128      # TPU vreg lane width
SUBLANE = 8     # f32 sublane height


def _round_up(n, m):
    return (n + m - 1) // m * m


def decoder_seq_kernel(tok_ref,                     # VMEM (1, B_pad, 1) int32 (this step's tokens)
                       emb_ref,                     # VMEM (Vr_pad, E_pad) bf16 (resident)
                       h0_ref,                      # VMEM (B_pad, H_pad) f32   (resident)
                       w_i_ref, w_h_ref,            # VMEM (E_pad, 3H_pad)/(H_pad, 3H_pad) bf16
                       b_i_ref, b_h_ref,            # VMEM (1, 3H_pad) f32
                       wd_ref, bd_ref,              # VMEM (H_pad, V_pad) bf16 / (1, V_pad) f32
                       logp_ref,                    # VMEM (1, B_pad, V_pad) f32 (per-step out)
                       hfin_ref,                    # VMEM (B_pad, H_pad) f32    (final h out)
                       h_carry,                     # VMEM scratch (B_pad, H_pad) f32
                       *, H_pad, Vr_pad):
    t = pl.program_id(0)

    @pl.when(t == 0)
    def _():
        h_carry[...] = h0_ref[...]

    h = h_carry[...]                                               # (B_pad, H_pad) f32

    # h-path gate matmul first: it does not depend on the embedding gather.
    gh = jnp.dot(h.astype(w_h_ref.dtype), w_h_ref[...],
                 preferred_element_type=jnp.float32) + b_h_ref[...]

    # ---- embedding gather as a one-hot matmul on the MXU ----
    tok = tok_ref[0]                                               # (B_pad, 1) int32
    col = jax.lax.broadcasted_iota(jnp.int32, (tok.shape[0], Vr_pad), 1)
    onehot = (col == tok).astype(emb_ref.dtype)                    # (B_pad, Vr_pad) bf16
    x = jnp.dot(onehot, emb_ref[...],
                preferred_element_type=jnp.float32).astype(w_i_ref.dtype)   # (B_pad, E_pad) bf16

    # ---- fused GRU gate matmul (gate order r | z | n), f32 accumulation ----
    gi = jnp.dot(x, w_i_ref[...], preferred_element_type=jnp.float32) + b_i_ref[...]

    r = jax.nn.sigmoid(gi[:, 0 * H_pad:1 * H_pad] + gh[:, 0 * H_pad:1 * H_pad])
    z = jax.nn.sigmoid(gi[:, 1 * H_pad:2 * H_pad] + gh[:, 1 * H_pad:2 * H_pad])
    n = jnp.tanh(gi[:, 2 * H_pad:3 * H_pad] + r * gh[:, 2 * H_pad:3 * H_pad])
    h_new = (1.0 - z) * n + z * h                                  # (B_pad, H_pad) f32

    # ---- dense projection to (padded) vocab; padded lanes carry a -1e30 bias ----
    logits = jnp.dot(h_new.astype(wd_ref.dtype), wd_ref[...],
                     preferred_element_type=jnp.float32) + bd_ref[...]      # (B_pad, V_pad) f32

    # ---- numerically stable log_softmax over the vocab axis ----
    m = jnp.max(logits, axis=-1, keepdims=True)
    shifted = logits - m
    lse = jnp.log(jnp.sum(jnp.exp(shifted), axis=-1, keepdims=True))

    logp_ref[0, :, :] = shifted - lse
    h_carry[...] = h_new
    hfin_ref[...] = h_new


def init_params(key, vocab_size, hidden_size, embedding_dim):
    """Logical (unfused, unpadded) f32 params; weights stored pre-transposed as (in_dim, out_dim)."""
    ks = jax.random.split(key, 15)
    s = 0.1
    f32 = jnp.float32
    return {
        "embedding": jax.random.normal(ks[0], (vocab_size, embedding_dim), f32) * s,
        "w_ir": jax.random.normal(ks[1], (embedding_dim, hidden_size), f32) * s,
        "w_iz": jax.random.normal(ks[2], (embedding_dim, hidden_size), f32) * s,
        "w_in": jax.random.normal(ks[3], (embedding_dim, hidden_size), f32) * s,
        "w_hr": jax.random.normal(ks[4], (hidden_size, hidden_size), f32) * s,
        "w_hz": jax.random.normal(ks[5], (hidden_size, hidden_size), f32) * s,
        "w_hn": jax.random.normal(ks[6], (hidden_size, hidden_size), f32) * s,
        "b_ir": jax.random.normal(ks[7], (1, hidden_size), f32) * s,
        "b_iz": jax.random.normal(ks[8], (1, hidden_size), f32) * s,
        "b_in": jax.random.normal(ks[9], (1, hidden_size), f32) * s,
        "b_hr": jax.random.normal(ks[10], (1, hidden_size), f32) * s,
        "b_hz": jax.random.normal(ks[11], (1, hidden_size), f32) * s,
        "b_hn": jax.random.normal(ks[12], (1, hidden_size), f32) * s,
        "w_dense": jax.random.normal(ks[13], (hidden_size, vocab_size), f32) * s,
        "b_dense": jax.random.normal(ks[14], (1, vocab_size), f32) * s,
    }


def pack_params(p):
    """Fuse GRU gate weights, pad to lane-dense shapes, cast weights/table to bf16, bake V mask."""
    vocab, E = p["embedding"].shape
    H = p["w_hr"].shape[0]
    V = p["w_dense"].shape[1]
    E_pad, H_pad, V_pad = _round_up(E, LANE), _round_up(H, LANE), _round_up(V, LANE)
    Vr_pad = _round_up(vocab, LANE)   # embedding-table rows, lane-dense for the one-hot gather

    def pad2(a, rows, cols):
        return jnp.zeros((rows, cols), a.dtype).at[:a.shape[0], :a.shape[1]].set(a)

    bf16 = jnp.bfloat16
    packed = {
        # bf16 table: halves DMA/VMEM; the gathered matmul operand was bf16 anyway.
        "emb": pad2(p["embedding"], Vr_pad, E_pad).astype(bf16),
        "w_i": jnp.concatenate([pad2(p["w_ir"], E_pad, H_pad),
                                pad2(p["w_iz"], E_pad, H_pad),
                                pad2(p["w_in"], E_pad, H_pad)], axis=1).astype(bf16),
        "w_h": jnp.concatenate([pad2(p["w_hr"], H_pad, H_pad),
                                pad2(p["w_hz"], H_pad, H_pad),
                                pad2(p["w_hn"], H_pad, H_pad)], axis=1).astype(bf16),
        "b_i": jnp.concatenate([pad2(p["b_ir"], 1, H_pad),
                                pad2(p["b_iz"], 1, H_pad),
                                pad2(p["b_in"], 1, H_pad)], axis=1),
        "b_h": jnp.concatenate([pad2(p["b_hr"], 1, H_pad),
                                pad2(p["b_hz"], 1, H_pad),
                                pad2(p["b_hn"], 1, H_pad)], axis=1),
        "w_d": pad2(p["w_dense"], H_pad, V_pad).astype(bf16),
        # Mask baked into the bias: padded vocab lanes resolve to -1e30 logits for free.
        "b_d": jnp.full((1, V_pad), -1e30, jnp.float32).at[:, :V].set(p["b_dense"]),
    }
    dims = {"V": V, "H": H, "E": E, "vocab": vocab,
            "V_pad": V_pad, "H_pad": H_pad, "E_pad": E_pad, "Vr_pad": Vr_pad}
    return packed, dims


def decoder_forward_seq(tokens_seq, h0, packed, dims):
    """Fused T-step decode (teacher forced).

    tokens_seq: (T, B) int; h0: (1, B, H) f32.
    Returns (log_probs (T, B, V), h_final (1, B, H)).
    Weights/table are DMA'd once (constant index_maps) and stay VMEM-resident for all T steps;
    the hidden state is carried in VMEM scratch.
    """
    V, H = dims["V"], dims["H"]
    V_pad, H_pad, E_pad, Vr_pad = dims["V_pad"], dims["H_pad"], dims["E_pad"], dims["Vr_pad"]
    T, B = tokens_seq.shape
    B_pad = _round_up(B, SUBLANE)

    tok_pad = jnp.zeros((T, B_pad, 1), jnp.int32).at[:, :B, 0].set(tokens_seq.astype(jnp.int32))
    h0_pad = jnp.zeros((B_pad, H_pad), jnp.float32).at[:B, :H].set(h0[0])

    kernel = functools.partial(decoder_seq_kernel, H_pad=H_pad, Vr_pad=Vr_pad)
    const = lambda t: (0, 0)

    logp_pad, hfin_pad = pl.pallas_call(
        kernel,
        out_shape=(jax.ShapeDtypeStruct((T, B_pad, V_pad), jnp.float32),
                   jax.ShapeDtypeStruct((B_pad, H_pad), jnp.float32)),
        grid=(T,),
        in_specs=[
            pl.BlockSpec((1, B_pad, 1), lambda t: (t, 0, 0)),   # per-step token ids
            pl.BlockSpec((Vr_pad, E_pad), const),               # embedding table (resident)
            pl.BlockSpec((B_pad, H_pad), const),                # h0 (resident)
            pl.BlockSpec((E_pad, 3 * H_pad), const),            # fused W_i (resident)
            pl.BlockSpec((H_pad, 3 * H_pad), const),            # fused W_h (resident)
            pl.BlockSpec((1, 3 * H_pad), const),                # fused b_i
            pl.BlockSpec((1, 3 * H_pad), const),                # fused b_h
            pl.BlockSpec((H_pad, V_pad), const),                # W_dense (resident)
            pl.BlockSpec((1, V_pad), const),                    # b_dense (with baked mask)
        ],
        out_specs=(pl.BlockSpec((1, B_pad, V_pad), lambda t: (t, 0, 0)),
                   pl.BlockSpec((B_pad, H_pad), const)),
        scratch_shapes=[pltpu.VMEM((B_pad, H_pad), jnp.float32)],   # h carry across steps
        input_output_aliases={2: 1},        # h0_pad buffer reused for the final hidden state
        compiler_params=pltpu.CompilerParams(dimension_semantics=("arbitrary",)),
    )(tok_pad, packed["emb"], h0_pad,
      packed["w_i"], packed["w_h"], packed["b_i"], packed["b_h"],
      packed["w_d"], packed["b_d"])

    return logp_pad[:, :B, :V], hfin_pad[:B, :H][None, ...]


def decoder_forward(tokens, h0, packed, dims):
    """Exact nn.Module forward: tokens (B,) int, h0 (1,B,H) -> (log_probs (B,V), h_new (1,B,H))."""
    logp_seq, h_new = decoder_forward_seq(tokens[None, :], h0, packed, dims)
    return logp_seq[0], h_new


def decoder_reference_seq(tokens_seq, h0, packed, dims):
    """Pure-JAX mirror of the kernel math (bf16 matmul operands, f32 accumulation)."""
    H, V, H_pad = dims["H"], dims["V"], dims["H_pad"]
    bf16 = jnp.bfloat16
    T, B = tokens_seq.shape
    h = jnp.zeros((B, H_pad), jnp.float32).at[:, :H].set(h0[0])
    logps = []
    for t in range(T):
        x = packed["emb"][tokens_seq[t]]                                   # (B, E_pad) bf16
        gi = jnp.dot(x, packed["w_i"], preferred_element_type=jnp.float32) + packed["b_i"]
        gh = jnp.dot(h.astype(bf16), packed["w_h"],
                     preferred_element_type=jnp.float32) + packed["b_h"]
        r = jax.nn.sigmoid(gi[:, :H_pad] + gh[:, :H_pad])
        z = jax.nn.sigmoid(gi[:, H_pad:2 * H_pad] + gh[:, H_pad:2 * H_pad])
        n = jnp.tanh(gi[:, 2 * H_pad:] + r * gh[:, 2 * H_pad:])
        h = (1.0 - z) * n + z * h
        logits = (jnp.dot(h.astype(bf16), packed["w_d"],
                          preferred_element_type=jnp.float32) + packed["b_d"])[:, :V]
        logps.append(jax.nn.log_softmax(logits, axis=-1))
    return jnp.stack(logps, axis=0), h[:, :H][None, ...]


if __name__ == "__main__":
    vocab_size, hidden_size, embedding_dim = 64, 32, 16
    batch, T = 2, 5

    key = jax.random.PRNGKey(0)
    kp, kt, kh, ks = jax.random.split(key, 4)
    params = init_params(kp, vocab_size, hidden_size, embedding_dim)
    packed, dims = pack_params(params)

    tokens = jax.random.randint(kt, (batch,), 0, vocab_size, dtype=jnp.int32)
    h0 = jax.random.normal(kh, (1, batch, hidden_size), jnp.float32)

    # ---- single-step forward (the exact module semantics) ----
    fwd = jax.jit(functools.partial(decoder_forward, packed=packed, dims=dims))
    logp, h_new = fwd(tokens, h0)
    jax.block_until_ready((logp, h_new))

    assert logp.shape == (batch, vocab_size)
    assert h_new.shape == (1, batch, hidden_size)
    assert bool(jnp.all(jnp.isfinite(logp)))
    assert jnp.allclose(jnp.sum(jnp.exp(logp), axis=-1), 1.0, atol=1e-4)

    logp_ref, h_ref = decoder_reference_seq(tokens[None, :], h0, packed, dims)
    assert jnp.allclose(logp, logp_ref[0], atol=2e-3, rtol=2e-3)
    assert jnp.allclose(h_new, h_ref, atol=2e-3, rtol=2e-3)

    # ---- fused multi-step decode (weights stay VMEM-resident across T steps) ----
    tokens_seq = jax.random.randint(ks, (T, batch), 0, vocab_size, dtype=jnp.int32)
    fwd_seq = jax.jit(functools.partial(decoder_forward_seq, packed=packed, dims=dims))
    logp_seq, h_T = fwd_seq(tokens_seq, h0)
    jax.block_until_ready((logp_seq, h_T))

    assert logp_seq.shape == (T, batch, vocab_size)
    assert h_T.shape == (1, batch, hidden_size)
    assert bool(jnp.all(jnp.isfinite(logp_seq)))
    assert jnp.allclose(jnp.sum(jnp.exp(logp_seq), axis=-1), 1.0, atol=1e-4)

    logp_seq_ref, h_T_ref = decoder_reference_seq(tokens_seq, h0, packed, dims)
    assert jnp.allclose(logp_seq, logp_seq_ref, atol=3e-3, rtol=3e-3)
    assert jnp.allclose(h_T, h_T_ref, atol=3e-3, rtol=3e-3)

    print("KERNEL_OK")
</pallas_src>

<mosaic_0001>
module attributes {stable_mosaic.version = 11 : i64} {
  func.func @decoder_seq_kernel(%arg0: i32, %arg1: memref<1x8x1xi32, #tpu.memory_space<vmem>>, %arg2: memref<128x128xbf16, #tpu.memory_space<vmem>>, %arg3: memref<8x128xf32, #tpu.memory_space<vmem>>, %arg4: memref<128x384xbf16, #tpu.memory_space<vmem>>, %arg5: memref<128x384xbf16, #tpu.memory_space<vmem>>, %arg6: memref<1x384xf32, #tpu.memory_space<vmem>>, %arg7: memref<1x384xf32, #tpu.memory_space<vmem>>, %arg8: memref<128x128xbf16, #tpu.memory_space<vmem>>, %arg9: memref<1x128xf32, #tpu.memory_space<vmem>>, %arg10: memref<1x8x128xf32, #tpu.memory_space<vmem>>, %arg11: memref<8x128xf32, #tpu.memory_space<vmem>>, %arg12: memref<8x128xf32, #tpu.memory_space<vmem>>) attributes {dimension_semantics = [#tpu.dimension_semantics<arbitrary>], iteration_bounds = array<i64: 1>, scalar_prefetch = 0 : i64, scratch_operands = 1 : i64, tpu.core_type = #tpu.core_type<tc>, window_params = [{transform_indices = @transform_0, window_bounds = array<i64: 1, 8, 1>}, {pipeline_mode = #tpu.pipeline_mode<synchronous>, transform_indices = @transform_1, window_bounds = array<i64: 128, 128>}, {pipeline_mode = #tpu.pipeline_mode<synchronous>, transform_indices = @transform_2, window_bounds = array<i64: 8, 128>}, {pipeline_mode = #tpu.pipeline_mode<synchronous>, transform_indices = @transform_3, window_bounds = array<i64: 128, 384>}, {pipeline_mode = #tpu.pipeline_mode<synchronous>, transform_indices = @transform_4, window_bounds = array<i64: 128, 384>}, {pipeline_mode = #tpu.pipeline_mode<synchronous>, transform_indices = @transform_5, window_bounds = array<i64: 1, 384>}, {pipeline_mode = #tpu.pipeline_mode<synchronous>, transform_indices = @transform_6, window_bounds = array<i64: 1, 384>}, {pipeline_mode = #tpu.pipeline_mode<synchronous>, transform_indices = @transform_7, window_bounds = array<i64: 128, 128>}, {pipeline_mode = #tpu.pipeline_mode<synchronous>, transform_indices = @transform_8, window_bounds = array<i64: 1, 128>}, {transform_indices = @transform_9, window_bounds = array<i64: 1, 8, 128>}, {pipeline_mode = #tpu.pipeline_mode<synchronous>, transform_indices = @transform_10, window_bounds = array<i64: 8, 128>}]} {
    %c0_i32 = arith.constant 0 : i32
    %0 = arith.cmpi eq, %arg0, %c0_i32 : i32
    %1 = arith.extui %0 : i1 to i32
    %c0_i32_0 = arith.constant 0 : i32
    %2 = arith.cmpi ne, %1, %c0_i32_0 : i32
    scf.if %2 {
      %c0_34 = arith.constant 0 : index
      %c0_35 = arith.constant 0 : index
      %73 = vector.load %arg3[%c0_34, %c0_35] : memref<8x128xf32, #tpu.memory_space<vmem>>, vector<8x128xf32>
      %c0_36 = arith.constant 0 : index
      %c0_37 = arith.constant 0 : index
      %74 = vector.load %arg12[%c0_36, %c0_37] : memref<8x128xf32, #tpu.memory_space<vmem>>, vector<8x128xf32>
      tpu.vector_store %arg12[%c0_36, %c0_37], %73 {strides = array<i32>} : memref<8x128xf32, #tpu.memory_space<vmem>>, vector<8x128xf32>,
    } else {
    }
    %c0 = arith.constant 0 : index
    %c0_1 = arith.constant 0 : index
    %3 = vector.load %arg12[%c0, %c0_1] : memref<8x128xf32, #tpu.memory_space<vmem>>, vector<8x128xf32>
    %4 = arith.truncf %3 : vector<8x128xf32> to vector<8x128xbf16>
    %c0_2 = arith.constant 0 : index
    %c0_3 = arith.constant 0 : index
    %5 = vector.load %arg5[%c0_2, %c0_3] : memref<128x384xbf16, #tpu.memory_space<vmem>>, vector<128x384xbf16>
    %cst = arith.constant dense<0.000000e+00> : vector<8x384xf32>
    %6 = tpu.matmul %4, %5, %cst {dimension_numbers = #tpu.dot_dimension_numbers<[1], [0], [0], [1], [0, 0, 1, 1], [], []>} : vector<8x128xbf16>, vector<128x384xbf16>, vector<8x384xf32> -> vector<8x384xf32>
    %c0_4 = arith.constant 0 : index
    %c0_5 = arith.constant 0 : index
    %7 = vector.load %arg7[%c0_4, %c0_5] : memref<1x384xf32, #tpu.memory_space<vmem>>, vector<1x384xf32>
    %8 = vector.broadcast %7 : vector<1x384xf32> to vector<8x384xf32>
    %9 = arith.addf %6, %8 : vector<8x384xf32>
    %c0_6 = arith.constant 0 : index
    %c0_7 = arith.constant 0 : index
    %c0_8 = arith.constant 0 : index
    %10 = vector.load %arg1[%c0_6, %c0_7, %c0_8] : memref<1x8x1xi32, #tpu.memory_space<vmem>>, vector<1x8x1xi32>
    %11 = vector.shape_cast %10 : vector<1x8x1xi32> to vector<8x1xi32>
    %12 = tpu.iota {dimensions = array<i32: 1>} : vector<8x128xi32>
    %13 = vector.broadcast %11 : vector<8x1xi32> to vector<8x128xi32>
    %14 = arith.cmpi eq, %12, %13 : vector<8x128xi32>
    %15 = arith.extui %14 : vector<8x128xi1> to vector<8x128xi32>
    %16 = arith.sitofp %15 : vector<8x128xi32> to vector<8x128xf32>
    %17 = arith.truncf %16 : vector<8x128xf32> to vector<8x128xbf16>
    %c0_9 = arith.constant 0 : index
    %c0_10 = arith.constant 0 : index
    %18 = vector.load %arg2[%c0_9, %c0_10] : memref<128x128xbf16, #tpu.memory_space<vmem>>, vector<128x128xbf16>
    %cst_11 = arith.constant dense<0.000000e+00> : vector<8x128xf32>
    %19 = tpu.matmul %17, %18, %cst_11 {dimension_numbers = #tpu.dot_dimension_numbers<[1], [0], [0], [1], [0, 0, 1, 1], [], []>} : vector<8x128xbf16>, vector<128x128xbf16>, vector<8x128xf32> -> vector<8x128xf32>
    %20 = arith.truncf %19 : vector<8x128xf32> to vector<8x128xbf16>
    %c0_12 = arith.constant 0 : index
    %c0_13 = arith.constant 0 : index
    %21 = vector.load %arg4[%c0_12, %c0_13] : memref<128x384xbf16, #tpu.memory_space<vmem>>, vector<128x384xbf16>
    %cst_14 = arith.constant dense<0.000000e+00> : vector<8x384xf32>
    %22 = tpu.matmul %20, %21, %cst_14 {dimension_numbers = #tpu.dot_dimension_numbers<[1], [0], [0], [1], [0, 0, 1, 1], [], []>} : vector<8x128xbf16>, vector<128x384xbf16>, vector<8x384xf32> -> vector<8x384xf32>
    %c0_15 = arith.constant 0 : index
    %c0_16 = arith.constant 0 : index
    %23 = vector.load %arg6[%c0_15, %c0_16] : memref<1x384xf32, #tpu.memory_space<vmem>>, vector<1x384xf32>
    %24 = vector.broadcast %23 : vector<1x384xf32> to vector<8x384xf32>
    %25 = arith.addf %22, %24 : vector<8x384xf32>
    %26 = vector.extract_strided_slice %25 {offsets = [0, 0], sizes = [8, 128], strides = [1, 1]} : vector<8x384xf32> to vector<8x128xf32>
    %27 = vector.extract_strided_slice %9 {offsets = [0, 0], sizes = [8, 128], strides = [1, 1]} : vector<8x384xf32> to vector<8x128xf32>
    %28 = arith.addf %26, %27 : vector<8x128xf32>
    %29 = arith.negf %28 : vector<8x128xf32>
    %30 = math.exp %29 : vector<8x128xf32>
    %cst_17 = arith.constant 1.000000e+00 : f32
    %31 = vector.broadcast %cst_17 : f32 to vector<8x128xf32>
    %32 = arith.addf %31, %30 : vector<8x128xf32>
    %33 = arith.divf %31, %32 : vector<8x128xf32>
    %34 = vector.extract_strided_slice %25 {offsets = [0, 128], sizes = [8, 128], strides = [1, 1]} : vector<8x384xf32> to vector<8x128xf32>
    %35 = vector.extract_strided_slice %9 {offsets = [0, 128], sizes = [8, 128], strides = [1, 1]} : vector<8x384xf32> to vector<8x128xf32>
    %36 = arith.addf %34, %35 : vector<8x128xf32>
    %37 = arith.negf %36 : vector<8x128xf32>
    %38 = math.exp %37 : vector<8x128xf32>
    %cst_18 = arith.constant 1.000000e+00 : f32
    %39 = vector.broadcast %cst_18 : f32 to vector<8x128xf32>
    %40 = arith.addf %39, %38 : vector<8x128xf32>
    %41 = arith.divf %39, %40 : vector<8x128xf32>
    %42 = vector.extract_strided_slice %25 {offsets = [0, 256], sizes = [8, 128], strides = [1, 1]} : vector<8x384xf32> to vector<8x128xf32>
    %43 = vector.extract_strided_slice %9 {offsets = [0, 256], sizes = [8, 128], strides = [1, 1]} : vector<8x384xf32> to vector<8x128xf32>
    %44 = arith.mulf %33, %43 : vector<8x128xf32>
    %45 = arith.addf %42, %44 : vector<8x128xf32>
    %46 = math.tanh %45 : vector<8x128xf32>
    %cst_19 = arith.constant 1.000000e+00 : f32
    %47 = vector.broadcast %cst_19 : f32 to vector<8x128xf32>
    %48 = arith.subf %47, %41 : vector<8x128xf32>
    %49 = arith.mulf %48, %46 : vector<8x128xf32>
    %50 = arith.mulf %41, %3 : vector<8x128xf32>
    %51 = arith.addf %49, %50 : vector<8x128xf32>
    %52 = arith.truncf %51 : vector<8x128xf32> to vector<8x128xbf16>
    %c0_20 = arith.constant 0 : index
    %c0_21 = arith.constant 0 : index
    %53 = vector.load %arg8[%c0_20, %c0_21] : memref<128x128xbf16, #tpu.memory_space<vmem>>, vector<128x128xbf16>
    %cst_22 = arith.constant dense<0.000000e+00> : vector<8x128xf32>
    %54 = tpu.matmul %52, %53, %cst_22 {dimension_numbers = #tpu.dot_dimension_numbers<[1], [0], [0], [1], [0, 0, 1, 1], [], []>} : vector<8x128xbf16>, vector<128x128xbf16>, vector<8x128xf32> -> vector<8x128xf32>
    %c0_23 = arith.constant 0 : index
    %c0_24 = arith.constant 0 : index
    %55 = vector.load %arg9[%c0_23, %c0_24] : memref<1x128xf32, #tpu.memory_space<vmem>>, vector<1x128xf32>
    %56 = vector.broadcast %55 : vector<1x128xf32> to vector<8x128xf32>
    %57 = arith.addf %54, %56 : vector<8x128xf32>
    %cst_25 = arith.constant dense<0xFF800000> : vector<8xf32>
    %58 = vector.multi_reduction <maximumf>, %57, %cst_25 [1] : vector<8x128xf32> to vector<8xf32>
    %59 = vector.shape_cast %58 : vector<8xf32> to vector<8x1xf32>
    %60 = vector.broadcast %59 : vector<8x1xf32> to vector<8x128xf32>
    %61 = arith.subf %57, %60 : vector<8x128xf32>
    %62 = math.exp %61 : vector<8x128xf32>
    %cst_26 = arith.constant dense<0.000000e+00> : vector<8xf32>
    %63 = vector.multi_reduction <add>, %62, %cst_26 [1] : vector<8x128xf32> to vector<8xf32>
    %64 = vector.shape_cast %63 : vector<8xf32> to vector<8x1xf32>
    %65 = math.log %64 : vector<8x1xf32>
    %66 = vector.broadcast %65 : vector<8x1xf32> to vector<8x128xf32>
    %67 = arith.subf %61, %66 : vector<8x128xf32>
    %c0_27 = arith.constant 0 : index
    %c0_28 = arith.constant 0 : index
    %c0_29 = arith.constant 0 : index
    %68 = vector.load %arg10[%c0_27, %c0_28, %c0_29] : memref<1x8x128xf32, #tpu.memory_space<vmem>>, vector<1x8x128xf32>
    %69 = vector.shape_cast %68 : vector<1x8x128xf32> to vector<8x128xf32>
    %70 = vector.shape_cast %67 : vector<8x128xf32> to vector<1x8x128xf32>
    tpu.vector_store %arg10[%c0_27, %c0_28, %c0_29], %70 {strides = array<i32>} : memref<1x8x128xf32, #tpu.memory_space<vmem>>, vector<1x8x128xf32>,
    %c0_30 = arith.constant 0 : index
    %c0_31 = arith.constant 0 : index
    %71 = vector.load %arg12[%c0_30, %c0_31] : memref<8x128xf32, #tpu.memory_space<vmem>>, vector<8x128xf32>
    tpu.vector_store %arg12[%c0_30, %c0_31], %51 {strides = array<i32>} : memref<8x128xf32, #tpu.memory_space<vmem>>, vector<8x128xf32>,
    %c0_32 = arith.constant 0 : index
    %c0_33 = arith.constant 0 : index
    %72 = vector.load %arg11[%c0_32, %c0_33] : memref<8x128xf32, #tpu.memory_space<vmem>>, vector<8x128xf32>
    tpu.vector_store %arg11[%c0_32, %c0_33], %51 {strides = array<i32>} : memref<8x128xf32, #tpu.memory_space<vmem>>, vector<8x128xf32>,
    return
  }
  func.func @transform_0(%arg0: i32) -> (i32, i32, i32) {
    %c0_i32 = arith.constant 0 : i32
    %c0_i32_0 = arith.constant 0 : i32
    %c0_i32_1 = arith.constant 0 : i32
    return %arg0, %c0_i32, %c0_i32_0 : i32, i32, i32
  }
  func.func @transform_1(%arg0: i32) -> (i32, i32) {
    %c0_i32 = arith.constant 0 : i32
    %c0_i32_0 = arith.constant 0 : i32
    %c0_i32_1 = arith.constant 0 : i32
    return %c0_i32, %c0_i32_0 : i32, i32
  }
  func.func @transform_2(%arg0: i32) -> (i32, i32) {
    %c0_i32 = arith.constant 0 : i32
    %c0_i32_0 = arith.constant 0 : i32
    %c0_i32_1 = arith.constant 0 : i32
    return %c0_i32, %c0_i32_0 : i32, i32
  }
  func.func @transform_3(%arg0: i32) -> (i32, i32) {
    %c0_i32 = arith.constant 0 : i32
    %c0_i32_0 = arith.constant 0 : i32
    %c0_i32_1 = arith.constant 0 : i32
    return %c0_i32, %c0_i32_0 : i32, i32
  }
  func.func @transform_4(%arg0: i32) -> (i32, i32) {
    %c0_i32 = arith.constant 0 : i32
    %c0_i32_0 = arith.constant 0 : i32
    %c0_i32_1 = arith.constant 0 : i32
    return %c0_i32, %c0_i32_0 : i32, i32
  }
  func.func @transform_5(%arg0: i32) -> (i32, i32) {
    %c0_i32 = arith.constant 0 : i32
    %c0_i32_0 = arith.constant 0 : i32
    %c0_i32_1 = arith.constant 0 : i32
    return %c0_i32, %c0_i32_0 : i32, i32
  }
  func.func @transform_6(%arg0: i32) -> (i32, i32) {
    %c0_i32 = arith.constant 0 : i32
    %c0_i32_0 = arith.constant 0 : i32
    %c0_i32_1 = arith.constant 0 : i32
    return %c0_i32, %c0_i32_0 : i32, i32
  }
  func.func @transform_7(%arg0: i32) -> (i32, i32) {
    %c0_i32 = arith.constant 0 : i32
    %c0_i32_0 = arith.constant 0 : i32
    %c0_i32_1 = arith.constant 0 : i32
    return %c0_i32, %c0_i32_0 : i32, i32
  }
  func.func @transform_8(%arg0: i32) -> (i32, i32) {
    %c0_i32 = arith.constant 0 : i32
    %c0_i32_0 = arith.constant 0 : i32
    %c0_i32_1 = arith.constant 0 : i32
    return %c0_i32, %c0_i32_0 : i32, i32
  }
  func.func @transform_9(%arg0: i32) -> (i32, i32, i32) {
    %c0_i32 = arith.constant 0 : i32
    %c0_i32_0 = arith.constant 0 : i32
    %c0_i32_1 = arith.constant 0 : i32
    return %arg0, %c0_i32, %c0_i32_0 : i32, i32, i32
  }
  func.func @transform_10(%arg0: i32) -> (i32, i32) {
    %c0_i32 = arith.constant 0 : i32
    %c0_i32_0 = arith.constant 0 : i32
    %c0_i32_1 = arith.constant 0 : i32
    return %c0_i32, %c0_i32_0 : i32, i32
  }
}

</mosaic_0001>

<llo_original>
// kernel: decoder_forward.1
$region0: #{decoder_forward.1}
  #allocation0 [shape = 'u32[]', space=smem, size = 0x4, offset = 0x4, fixed_abs, tag = 'smem constant byte address 0x4 - core index']
  #allocation1 [shape = 'u32[144,128]{1,0:T(1,128)}', space=vmem, size = 0x12000, scoped, tag = 'internal scratch']
  #allocation2 [shape = 'f32[8,128]{1,0:T(8,128)}', space=vmem, size = 0x1000, scoped, tag = 'scratch operand']
  %s0 = inlined_call_operand.vmem [shape: s32[1,8,1], index: 0, kind: input, shape index: {}]
  %s1 = inlined_call_operand.vmem [shape: bf16[128,128], index: 1, kind: input, shape index: {}]
  %s2 = inlined_call_operand.vmem [shape: f32[8,128], index: 2, kind: input, shape index: {}, may-alias: {2,10}]
  %s3 = inlined_call_operand.vmem [shape: bf16[128,384], index: 3, kind: input, shape index: {}]
  %s4 = inlined_call_operand.vmem [shape: bf16[128,384], index: 4, kind: input, shape index: {}]
  %s5 = inlined_call_operand.vmem [shape: f32[1,384], index: 5, kind: input, shape index: {}]
  %s6 = inlined_call_operand.vmem [shape: f32[1,384], index: 6, kind: input, shape index: {}]
  %s7 = inlined_call_operand.vmem [shape: bf16[128,128], index: 7, kind: input, shape index: {}]
  %s8 = inlined_call_operand.vmem [shape: f32[1,128], index: 8, kind: input, shape index: {}]
  %s9 = inlined_call_operand.vmem [shape: f32[1,8,128], index: 9, kind: output, shape index: {0}]
  %s10 = inlined_call_operand.vmem [shape: f32[8,128], index: 10, kind: output, shape index: {1}, may-alias: {2,10}]
  %11 = xla_tuple %s9, %s10
  %s12 = sld [smem:[#allocation0]]
  $region58: #{decoder_forward.1} parent=0
    _
  %s14 = ssub.s32 1, %s12
  %s15 = scalar_select 0, %s14, %s12
  // Predicated region
  $region2: #{decoder_forward.1} parent=0 // pred_check
    _
  $region3: #{decoder_forward.1} parent=0 // pred_check_branch
    %17 = sbr.rel (0) target = $region5
  $region4: #{decoder_forward.1} parent=0 // pred_region
    _
  $region5: #{decoder_forward.1} parent=0 // pred_fallthru
    _
  // Predicated region
  $region6: #{decoder_forward.1} parent=0 // pred_check
    _
  $region7: #{decoder_forward.1} parent=0 // pred_check_branch
    %19 = sbr.rel (0) target = $region9
  $region8: #{decoder_forward.1} parent=0 // pred_region
    _
  $region9: #{decoder_forward.1} parent=0 // pred_fallthru
    _
  // Predicated region
  $region10: #{decoder_forward.1} parent=0 // pred_check
    _
  $region11: #{decoder_forward.1} parent=0 // pred_check_branch
    %21 = sbr.rel (0) target = $region13
  $region12: #{decoder_forward.1} parent=0 // pred_region
    _
  $region13: #{decoder_forward.1} parent=0 // pred_fallthru
    _
  // Predicated region
  $region14: #{decoder_forward.1} parent=0 // pred_check
    _
  $region15: #{decoder_forward.1} parent=0 // pred_check_branch
    %23 = sbr.rel (0) target = $region17
  $region16: #{decoder_forward.1} parent=0 // pred_region
    _
  $region17: #{decoder_forward.1} parent=0 // pred_fallthru
    _
  // Predicated region
  $region18: #{decoder_forward.1} parent=0 // pred_check
    _
  $region19: #{decoder_forward.1} parent=0 // pred_check_branch
    %25 = sbr.rel (0) target = $region21
  $region20: #{decoder_forward.1} parent=0 // pred_region
    _
  $region21: #{decoder_forward.1} parent=0 // pred_fallthru
    _
  // Predicated region
  $region22: #{decoder_forward.1} parent=0 // pred_check
    _
  $region23: #{decoder_forward.1} parent=0 // pred_check_branch
    %27 = sbr.rel (0) target = $region25
  $region24: #{decoder_forward.1} parent=0 // pred_region
    _
  $region25: #{decoder_forward.1} parent=0 // pred_fallthru
    _
  // Predicated region
  $region26: #{decoder_forward.1} parent=0 // pred_check
    _
  $region27: #{decoder_forward.1} parent=0 // pred_check_branch
    %29 = sbr.rel (0) target = $region29
  $region28: #{decoder_forward.1} parent=0 // pred_region
    _
  $region29: #{decoder_forward.1} parent=0 // pred_fallthru
    _
  // Predicated region
  $region30: #{decoder_forward.1} parent=0 // pred_check
    _
  $region31: #{decoder_forward.1} parent=0 // pred_check_branch
    %31 = sbr.rel (0) target = $region33
  $region32: #{decoder_forward.1} parent=0 // pred_region
    _
  $region33: #{decoder_forward.1} parent=0 // pred_fallthru
    _
  // Predicated region
  $region34: #{decoder_forward.1} parent=0 // pred_check
    _
  $region35: #{decoder_forward.1} parent=0 // pred_check_branch
    %33 = sbr.rel (0) target = $region37
  $region36: #{decoder_forward.1} parent=0 // pred_region
    _
  $region37: #{decoder_forward.1} parent=0 // pred_fallthru
    _
  %p35 = scmp.eq.s32.totalorder 0, 0
  // Predicated region
  $region38: #{decoder_forward.1} parent=0 // pred_check
    %p36 = pneg %p35
  $region39: #{decoder_forward.1} parent=0 // pred_check_branch
    %38 = sbr.rel (%p36) target = $region41
  $region40: #{decoder_forward.1} parent=0 // pred_region
    %v39 = vld [vmem:[%s2] sm:$0xff]
    %40 = vst [vmem:[#allocation2] sm:$0xff] %v39
  $region41: #{decoder_forward.1} parent=0 // pred_fallthru
    _
  %v41 = vld [vmem:[#allocation2] sm:$0xff]
  %v42 = vpack.c.bf16 %v41, %v41
  %v43 = vld [vmem:[%s4] sm:$0xff]
  %v44 = vld [vmem:[%s4 + $0x8] sm:$0xf]
  %v45 = vld [vmem:[%s4 + $0xc] sm:$0xff]
  %v46 = vld [vmem:[%s4 + $0x14] sm:$0xf]
  %v47 = vld [vmem:[%s4 + $0x18] sm:$0xff]
  %v48 = vld [vmem:[%s4 + $0x20] sm:$0xf]
  %v49 = vld [vmem:[%s4 + $0x24] sm:$0xff]
  %v50 = vld [vmem:[%s4 + $0x2c] sm:$0xf]
  %v51 = vld [vmem:[%s4 + $0x30] sm:$0xff]
  %v52 = vld [vmem:[%s4 + $0x38] sm:$0xf]
  %v53 = vld [vmem:[%s4 + $0x3c] sm:$0xff]
  %v54 = vld [vmem:[%s4 + $0x44] sm:$0xf]
  %v55 = vld [vmem:[%s4 + $0x48] sm:$0xff]
  %v56 = vld [vmem:[%s4 + $0x50] sm:$0xf]
  %v57 = vld [vmem:[%s4 + $0x54] sm:$0xff]
  %v58 = vld [vmem:[%s4 + $0x5c] sm:$0xf]
  %v59 = vld [vmem:[%s4 + $0x60] sm:$0xff]
  %v60 = vld [vmem:[%s4 + $0x68] sm:$0xf]
  %v61 = vld [vmem:[%s4 + $0x6c] sm:$0xff]
  %v62 = vld [vmem:[%s4 + $0x74] sm:$0xf]
  %v63 = vld [vmem:[%s4 + $0x78] sm:$0xff]
  %v64 = vld [vmem:[%s4 + $0x80] sm:$0xf]
  %v65 = vld [vmem:[%s4 + $0x84] sm:$0xff]
  %v66 = vld [vmem:[%s4 + $0x8c] sm:$0xf]
  %v67 = vld [vmem:[%s4 + $0x90] sm:$0xff]
  %v68 = vld [vmem:[%s4 + $0x98] sm:$0xf]
  %v69 = vld [vmem:[%s4 + $0x9c] sm:$0xff]
  %v70 = vld [vmem:[%s4 + $0xa4] sm:$0xf]
  %v71 = vld [vmem:[%s4 + $0xa8] sm:$0xff]
  %v72 = vld [vmem:[%s4 + $0xb0] sm:$0xf]
  %v73 = vld [vmem:[%s4 + $0xb4] sm:$0xff]
  %v74 = vld [vmem:[%s4 + $0xbc] sm:$0xf]
  %v75 = vld [vmem:[%s6] sm:$0x7]
  %v77 = vlaneseq
  %v78 = vshrl.u32 %v77, 7
  %v79 = vsub.s32 0, %v78
  %v80 = vrot.slane %v75, %v79
  %v81 = vlaneseq
  %v82 = vshrl.u32 %v81, 7
  %v83 = vsub.s32 1, %v82
  %v84 = vrot.slane %v75, %v83
  %v85 = vlaneseq
  %v86 = vshrl.u32 %v85, 7
  %v87 = vsub.s32 2, %v86
  %v88 = vrot.slane %v75, %v87
  %v124 = vunpack.c.l.b16 %v43
  %v125 = vunpack.c.h.b16 %v43
  %v126 = vunpack.c.l.b16 %v44
  %v127 = vunpack.c.l.b16 %v45
  %v128 = vunpack.c.h.b16 %v45
  %v129 = vunpack.c.l.b16 %v46
  %v130 = vunpack.c.l.b16 %v47
  %v131 = vunpack.c.h.b16 %v47
  %v132 = vunpack.c.l.b16 %v48
  %v133 = vunpack.c.l.b16 %v49
  %v134 = vunpack.c.h.b16 %v49
  %v135 = vunpack.c.l.b16 %v50
  %v136 = vunpack.c.l.b16 %v51
  %v137 = vunpack.c.h.b16 %v51
  %v138 = vunpack.c.l.b16 %v52
  %v139 = vunpack.c.l.b16 %v53
  %v140 = vunpack.c.h.b16 %v53
  %v141 = vunpack.c.l.b16 %v54
  %v142 = vunpack.c.l.b16 %v55
  %v143 = vunpack.c.h.b16 %v55
  %v144 = vunpack.c.l.b16 %v56
  %v145 = vunpack.c.l.b16 %v57
  %v146 = vunpack.c.h.b16 %v57
  %v147 = vunpack.c.l.b16 %v58
  %v148 = vunpack.c.l.b16 %v59
  %v149 = vunpack.c.h.b16 %v59
  %v150 = vunpack.c.l.b16 %v60
  %v151 = vunpack.c.l.b16 %v61
  %v152 = vunpack.c.h.b16 %v61
  %v153 = vunpack.c.l.b16 %v62
  %v154 = vunpack.c.l.b16 %v63
  %v155 = vunpack.c.h.b16 %v63
  %v156 = vunpack.c.l.b16 %v64
  %v157 = vunpack.c.l.b16 %v65
  %v158 = vunpack.c.h.b16 %v65
  %v159 = vunpack.c.l.b16 %v66
  %v160 = vunpack.c.l.b16 %v67
  %v161 = vunpack.c.h.b16 %v67
  %v162 = vunpack.c.l.b16 %v68
  %v163 = vunpack.c.l.b16 %v69
  %v164 = vunpack.c.h.b16 %v69
  %v165 = vunpack.c.l.b16 %v70
  %v166 = vunpack.c.l.b16 %v71
  %v167 = vunpack.c.h.b16 %v71
  %v168 = vunpack.c.l.b16 %v72
  %v169 = vunpack.c.l.b16 %v73
  %v170 = vunpack.c.h.b16 %v73
  %v171 = vunpack.c.l.b16 %v74
  %v172 = vpack.c.b16 %v127, %v124
  %v173 = vpack.c.b16 %v128, %v125
  %v174 = vpack.c.b16 %v129, %v126
  %v175 = vpack.c.b16 %v133, %v130
  %v176 = vpack.c.b16 %v134, %v131
  %v177 = vpack.c.b16 %v135, %v132
  %v178 = vpack.c.b16 %v139, %v136
  %v179 = vpack.c.b16 %v140, %v137
  %v180 = vpack.c.b16 %v141, %v138
  %v181 = vpack.c.b16 %v145, %v142
  %v182 = vpack.c.b16 %v146, %v143
  %v183 = vpack.c.b16 %v147, %v144
  %v184 = vpack.c.b16 %v151, %v148
  %v185 = vpack.c.b16 %v152, %v149
  %v186 = vpack.c.b16 %v153, %v150
  %v187 = vpack.c.b16 %v157, %v154
  %v188 = vpack.c.b16 %v158, %v155
  %v189 = vpack.c.b16 %v159, %v156
  %v190 = vpack.c.b16 %v163, %v160
  %v191 = vpack.c.b16 %v164, %v161
  %v192 = vpack.c.b16 %v165, %v162
  %v193 = vpack.c.b16 %v169, %v166
  %v194 = vpack.c.b16 %v170, %v167
  %v195 = vpack.c.b16 %v171, %v168
  %220 = vmatprep.subr.bf16.mxu0 %v173
  %221 = vmatpush1.bf16.msra.mxu0 %v172
  %222 = vmatprep.subr.bf16.mxu0 %v176
  %223 = vmatpush1.bf16.msra.mxu0 %v175
  %224 = vmatprep.subr.bf16.mxu0 %v179
  %225 = vmatpush1.bf16.msra.mxu0 %v178
  %226 = vmatprep.subr.bf16.mxu0 %v182
  %227 = vmatpush1.bf16.msra.mxu0 %v181
  %228 = vmatprep.subr.bf16.mxu0 %v185
  %229 = vmatpush1.bf16.msra.mxu0 %v184
  %230 = vmatprep.subr.bf16.mxu0 %v188
  %231 = vmatpush1.bf16.msra.mxu0 %v187
  %232 = vmatprep.subr.bf16.mxu0 %v191
  %233 = vmatpush1.bf16.msra.mxu0 %v190
  %234 = vmatprep.subr.bf16.mxu0 %v194
  %235 = vmatpush1.bf16.msra.mxu0 %v193
  %236 = vmatprep.subr.bf16.mxu0 0
  %237 = vmatpush1.bf16.msra.mxu0 0
  %238 = vmatprep.subr.bf16.mxu0 0
  %239 = vmatpush1.bf16.msra.mxu0 0
  %240 = vmatprep.subr.bf16.mxu0 0
  %241 = vmatpush1.bf16.msra.mxu0 0
  %242 = vmatprep.subr.bf16.mxu0 0
  %243 = vmatpush1.bf16.msra.mxu0 0
  %244 = vmatprep.subr.bf16.mxu0 0
  %245 = vmatpush1.bf16.msra.mxu0 0
  %246 = vmatprep.subr.bf16.mxu0 0
  %247 = vmatpush1.bf16.msra.mxu0 0
  %248 = vmatprep.subr.bf16.mxu0 0
  %249 = vmatpush1.bf16.msra.mxu0 0
  %250 = vmatprep.subr.bf16.mxu0 0
  %251 = vmatpush1.bf16.msra.mxu0 0
  %252 = vmatprep.mubr.bf16.mxu0 0
  %253 = vmatmul.mubr.bf16.gmra.mrb[0].mxu0 %v42
  %v254 = vpop.f32.mrb[0].mxu0
  %v255 = vadd.f32 %v80, %v254
  %v256 = vpop.f32.mrb[0].mxu0
  %v257 = vadd.f32 %v84, %v256
  %v258 = vpop.f32.mrb[0].mxu0
  %v259 = vpop.f32.mrb[0].mxu0
  %260 = vdwg.mxu0
  %261 = vmatprep.subr.bf16.mxu0 0
  %262 = vmatpush1.bf16.msra.mxu0 %v174
  %263 = vmatprep.subr.bf16.mxu0 0
  %264 = vmatpush1.bf16.msra.mxu0 %v177
  %265 = vmatprep.subr.bf16.mxu0 0
  %266 = vmatpush1.bf16.msra.mxu0 %v180
  %267 = vmatprep.subr.bf16.mxu0 0
  %268 = vmatpush1.bf16.msra.mxu0 %v183
  %269 = vmatprep.subr.bf16.mxu0 0
  %270 = vmatpush1.bf16.msra.mxu0 %v186
  %271 = vmatprep.subr.bf16.mxu0 0
  %272 = vmatpush1.bf16.msra.mxu0 %v189
  %273 = vmatprep.subr.bf16.mxu0 0
  %274 = vmatpush1.bf16.msra.mxu0 %v192
  %275 = vmatprep.subr.bf16.mxu0 0
  %276 = vmatpush1.bf16.msra.mxu0 %v195
  %277 = vmatprep.subr.bf16.mxu0 0
  %278 = vmatpush1.bf16.msra.mxu0 0
  %279 = vmatprep.subr.bf16.mxu0 0
  %280 = vmatpush1.bf16.msra.mxu0 0
  %281 = vmatprep.subr.bf16.mxu0 0
  %282 = vmatpush1.bf16.msra.mxu0 0
  %283 = vmatprep.subr.bf16.mxu0 0
  %284 = vmatpush1.bf16.msra.mxu0 0
  %285 = vmatprep.subr.bf16.mxu0 0
  %286 = vmatpush1.bf16.msra.mxu0 0
  %287 = vmatprep.subr.bf16.mxu0 0
  %288 = vmatpush1.bf16.msra.mxu0 0
  %289 = vmatprep.subr.bf16.mxu0 0
  %290 = vmatpush1.bf16.msra.mxu0 0
  %291 = vmatprep.subr.bf16.mxu0 0
  %292 = vmatpush1.bf16.msra.mxu0 0
  %293 = vmatprep.mubr.bf16.mxu0 0
  %294 = vmatmul.mubr.bf16.gmra.mrb[0].mxu0 %v42
  %v295 = vpop.f32.mrb[0].mxu0
  %v296 = vadd.f32 %v88, %v295
  %v297 = vpop.f32.mrb[0].mxu0
  %v298 = vpop.f32.mrb[0].mxu0
  %v299 = vpop.f32.mrb[0].mxu0
  %300 = vdwg.mxu0
  %v301 = vld [vmem:[%s0] sm:$0xff]
  %v302 = vlaneseq
  %v303 = vand.u32 %v302, 127
  %304 = vset.pattern.permute.xlu0 0
  %305 = vperm.xlu0 %304, %v301
  %v306 = vpop.permute.xlu0 %305
  %vm307 = vcmp.eq.s32.totalorder %v303, %v306
  %v308 = vsel %vm307, 1, 0
  %v309 = vcvt.s32.f32 %v308
  %v310 = vpack.c.bf16 %v309, %v309
  %v311 = vld [vmem:[%s1] sm:$0xf]
  %v312 = vld [vmem:[%s1 + $0x4] sm:$0xf]
  %v313 = vld [vmem:[%s1 + $0x8] sm:$0xf]
  %v314 = vld [vmem:[%s1 + $0xc] sm:$0xf]
  %v315 = vld [vmem:[%s1 + $0x10] sm:$0xf]
  %v316 = vld [vmem:[%s1 + $0x14] sm:$0xf]
  %v317 = vld [vmem:[%s1 + $0x18] sm:$0xf]
  %v318 = vld [vmem:[%s1 + $0x1c] sm:$0xf]
  %v319 = vld [vmem:[%s1 + $0x20] sm:$0xf]
  %v320 = vld [vmem:[%s1 + $0x24] sm:$0xf]
  %v321 = vld [vmem:[%s1 + $0x28] sm:$0xf]
  %v322 = vld [vmem:[%s1 + $0x2c] sm:$0xf]
  %v323 = vld [vmem:[%s1 + $0x30] sm:$0xf]
  %v324 = vld [vmem:[%s1 + $0x34] sm:$0xf]
  %v325 = vld [vmem:[%s1 + $0x38] sm:$0xf]
  %v326 = vld [vmem:[%s1 + $0x3c] sm:$0xf]
  %v343 = vunpack.c.l.b16 %v311
  %v344 = vunpack.c.l.b16 %v312
  %v345 = vunpack.c.l.b16 %v313
  %v346 = vunpack.c.l.b16 %v314
  %v347 = vunpack.c.l.b16 %v315
  %v348 = vunpack.c.l.b16 %v316
  %v349 = vunpack.c.l.b16 %v317
  %v350 = vunpack.c.l.b16 %v318
  %v351 = vunpack.c.l.b16 %v319
  %v352 = vunpack.c.l.b16 %v320
  %v353 = vunpack.c.l.b16 %v321
  %v354 = vunpack.c.l.b16 %v322
  %v355 = vunpack.c.l.b16 %v323
  %v356 = vunpack.c.l.b16 %v324
  %v357 = vunpack.c.l.b16 %v325
  %v358 = vunpack.c.l.b16 %v326
  %v359 = vpack.c.b16 %v344, %v343
  %v360 = vpack.c.b16 %v346, %v345
  %v361 = vpack.c.b16 %v348, %v347
  %v362 = vpack.c.b16 %v350, %v349
  %v363 = vpack.c.b16 %v352, %v351
  %v364 = vpack.c.b16 %v354, %v353
  %v365 = vpack.c.b16 %v356, %v355
  %v366 = vpack.c.b16 %v358, %v357
  %375 = vmatprep.subr.bf16.mxu0 0
  %376 = vmatpush1.bf16.msra.mxu0 %v359
  %377 = vmatprep.subr.bf16.mxu0 0
  %378 = vmatpush1.bf16.msra.mxu0 %v360
  %379 = vmatprep.subr.bf16.mxu0 0
  %380 = vmatpush1.bf16.msra.mxu0 %v361
  %381 = vmatprep.subr.bf16.mxu0 0
  %382 = vmatpush1.bf16.msra.mxu0 %v362
  %383 = vmatprep.subr.bf16.mxu0 0
  %384 = vmatpush1.bf16.msra.mxu0 %v363
  %385 = vmatprep.subr.bf16.mxu0 0
  %386 = vmatpush1.bf16.msra.mxu0 %v364
  %387 = vmatprep.subr.bf16.mxu0 0
  %388 = vmatpush1.bf16.msra.mxu0 %v365
  %389 = vmatprep.subr.bf16.mxu0 0
  %390 = vmatpush1.bf16.msra.mxu0 %v366
  %391 = vmatprep.subr.bf16.mxu0 0
  %392 = vmatpush1.bf16.msra.mxu0 0
  %393 = vmatprep.subr.bf16.mxu0 0
  %394 = vmatpush1.bf16.msra.mxu0 0
  %395 = vmatprep.subr.bf16.mxu0 0
  %396 = vmatpush1.bf16.msra.mxu0 0
  %397 = vmatprep.subr.bf16.mxu0 0
  %398 = vmatpush1.bf16.msra.mxu0 0
  %399 = vmatprep.subr.bf16.mxu0 0
  %400 = vmatpush1.bf16.msra.mxu0 0
  %401 = vmatprep.subr.bf16.mxu0 0
  %402 = vmatpush1.bf16.msra.mxu0 0
  %403 = vmatprep.subr.bf16.mxu0 0
  %404 = vmatpush1.bf16.msra.mxu0 0
  %405 = vmatprep.subr.bf16.mxu0 0
  %406 = vmatpush1.bf16.msra.mxu0 0
  %407 = vmatprep.mubr.bf16.mxu0 0
  %408 = vmatmul.mubr.bf16.gmra.mrb[0].mxu0 %v310
  %v409 = vpop.f32.mrb[0].mxu0
  %v410 = vadd.f32 0.0, %v409
  %v411 = vpop.f32.mrb[0].mxu0
  %v412 = vpop.f32.mrb[0].mxu0
  %v413 = vpop.f32.mrb[0].mxu0
  %414 = vdwg.mxu0
  %v415 = vpack.c.bf16 %v410, %v410
  %v416 = vld [vmem:[%s3] sm:$0xff]
  %v417 = vld [vmem:[%s3 + $0x8] sm:$0xf]
  %v418 = vld [vmem:[%s3 + $0xc] sm:$0xff]
  %v419 = vld [vmem:[%s3 + $0x14] sm:$0xf]
  %v420 = vld [vmem:[%s3 + $0x18] sm:$0xff]
  %v421 = vld [vmem:[%s3 + $0x20] sm:$0xf]
  %v422 = vld [vmem:[%s3 + $0x24] sm:$0xff]
  %v423 = vld [vmem:[%s3 + $0x2c] sm:$0xf]
  %v424 = vld [vmem:[%s3 + $0x30] sm:$0xff]
  %v425 = vld [vmem:[%s3 + $0x38] sm:$0xf]
  %v426 = vld [vmem:[%s3 + $0x3c] sm:$0xff]
  %v427 = vld [vmem:[%s3 + $0x44] sm:$0xf]
  %v428 = vld [vmem:[%s3 + $0x48] sm:$0xff]
  %v429 = vld [vmem:[%s3 + $0x50] sm:$0xf]
  %v430 = vld [vmem:[%s3 + $0x54] sm:$0xff]
  %v431 = vld [vmem:[%s3 + $0x5c] sm:$0xf]
  %v432 = vld [vmem:[%s3 + $0x60] sm:$0xff]
  %v433 = vld [vmem:[%s3 + $0x68] sm:$0xf]
  %v434 = vld [vmem:[%s3 + $0x6c] sm:$0xff]
  %v435 = vld [vmem:[%s3 + $0x74] sm:$0xf]
  %v436 = vld [vmem:[%s3 + $0x78] sm:$0xff]
  %v437 = vld [vmem:[%s3 + $0x80] sm:$0xf]
  %v438 = vld [vmem:[%s3 + $0x84] sm:$0xff]
  %v439 = vld [vmem:[%s3 + $0x8c] sm:$0xf]
  %v440 = vld [vmem:[%s3 + $0x90] sm:$0xff]
  %v441 = vld [vmem:[%s3 + $0x98] sm:$0xf]
  %v442 = vld [vmem:[%s3 + $0x9c] sm:$0xff]
  %v443 = vld [vmem:[%s3 + $0xa4] sm:$0xf]
  %v444 = vld [vmem:[%s3 + $0xa8] sm:$0xff]
  %v445 = vld [vmem:[%s3 + $0xb0] sm:$0xf]
  %v446 = vld [vmem:[%s3 + $0xb4] sm:$0xff]
  %v447 = vld [vmem:[%s3 + $0xbc] sm:$0xf]
  %v448 = vld [vmem:[%s5] sm:$0x7]
  %v450 = vlaneseq
  %v451 = vshrl.u32 %v450, 7
  %v452 = vsub.s32 0, %v451
  %v453 = vrot.slane %v448, %v452
  %v454 = vlaneseq
  %v455 = vshrl.u32 %v454, 7
  %v456 = vsub.s32 1, %v455
  %v457 = vrot.slane %v448, %v456
  %v458 = vlaneseq
  %v459 = vshrl.u32 %v458, 7
  %v460 = vsub.s32 2, %v459
  %v461 = vrot.slane %v448, %v460
  %v497 = vunpack.c.l.b16 %v416
  %v498 = vunpack.c.h.b16 %v416
  %v499 = vunpack.c.l.b16 %v417
  %v500 = vunpack.c.l.b16 %v418
  %v501 = vunpack.c.h.b16 %v418
  %v502 = vunpack.c.l.b16 %v419
  %v503 = vunpack.c.l.b16 %v420
  %v504 = vunpack.c.h.b16 %v420
  %v505 = vunpack.c.l.b16 %v421
  %v506 = vunpack.c.l.b16 %v422
  %v507 = vunpack.c.h.b16 %v422
  %v508 = vunpack.c.l.b16 %v423
  %v509 = vunpack.c.l.b16 %v424
  %v510 = vunpack.c.h.b16 %v424
  %v511 = vunpack.c.l.b16 %v425
  %v512 = vunpack.c.l.b16 %v426
  %v513 = vunpack.c.h.b16 %v426
  %v514 = vunpack.c.l.b16 %v427
  %v515 = vunpack.c.l.b16 %v428
  %v516 = vunpack.c.h.b16 %v428
  %v517 = vunpack.c.l.b16 %v429
  %v518 = vunpack.c.l.b16 %v430
  %v519 = vunpack.c.h.b16 %v430
  %v520 = vunpack.c.l.b16 %v431
  %v521 = vunpack.c.l.b16 %v432
  %v522 = vunpack.c.h.b16 %v432
  %v523 = vunpack.c.l.b16 %v433
  %v524 = vunpack.c.l.b16 %v434
  %v525 = vunpack.c.h.b16 %v434
  %v526 = vunpack.c.l.b16 %v435
  %v527 = vunpack.c.l.b16 %v436
  %v528 = vunpack.c.h.b16 %v436
  %v529 = vunpack.c.l.b16 %v437
  %v530 = vunpack.c.l.b16 %v438
  %v531 = vunpack.c.h.b16 %v438
  %v532 = vunpack.c.l.b16 %v439
  %v533 = vunpack.c.l.b16 %v440
  %v534 = vunpack.c.h.b16 %v440
  %v535 = vunpack.c.l.b16 %v441
  %v536 = vunpack.c.l.b16 %v442
  %v537 = vunpack.c.h.b16 %v442
  %v538 = vunpack.c.l.b16 %v443
  %v539 = vunpack.c.l.b16 %v444
  %v540 = vunpack.c.h.b16 %v444
  %v541 = vunpack.c.l.b16 %v445
  %v542 = vunpack.c.l.b16 %v446
  %v543 = vunpack.c.h.b16 %v446
  %v544 = vunpack.c.l.b16 %v447
  %v545 = vpack.c.b16 %v500, %v497
  %v546 = vpack.c.b16 %v501, %v498
  %v547 = vpack.c.b16 %v502, %v499
  %v548 = vpack.c.b16 %v506, %v503
  %v549 = vpack.c.b16 %v507, %v504
  %v550 = vpack.c.b16 %v508, %v505
  %v551 = vpack.c.b16 %v512, %v509
  %v552 = vpack.c.b16 %v513, %v510
  %v553 = vpack.c.b16 %v514, %v511
  %v554 = vpack.c.b16 %v518, %v515
  %v555 = vpack.c.b16 %v519, %v516
  %v556 = vpack.c.b16 %v520, %v517
  %v557 = vpack.c.b16 %v524, %v521
  %v558 = vpack.c.b16 %v525, %v522
  %v559 = vpack.c.b16 %v526, %v523
  %v560 = vpack.c.b16 %v530, %v527
  %v561 = vpack.c.b16 %v531, %v528
  %v562 = vpack.c.b16 %v532, %v529
  %v563 = vpack.c.b16 %v536, %v533
  %v564 = vpack.c.b16 %v537, %v534
  %v565 = vpack.c.b16 %v538, %v535
  %v566 = vpack.c.b16 %v542, %v539
  %v567 = vpack.c.b16 %v543, %v540
  %v568 = vpack.c.b16 %v544, %v541
  %593 = vmatprep.subr.bf16.mxu0 %v546
  %594 = vmatpush1.bf16.msra.mxu0 %v545
  %595 = vmatprep.subr.bf16.mxu0 %v549
  %596 = vmatpush1.bf16.msra.mxu0 %v548
  %597 = vmatprep.subr.bf16.mxu0 %v552
  %598 = vmatpush1.bf16.msra.mxu0 %v551
  %599 = vmatprep.subr.bf16.mxu0 %v555
  %600 = vmatpush1.bf16.msra.mxu0 %v554
  %601 = vmatprep.subr.bf16.mxu0 %v558
  %602 = vmatpush1.bf16.msra.mxu0 %v557
  %603 = vmatprep.subr.bf16.mxu0 %v561
  %604 = vmatpush1.bf16.msra.mxu0 %v560
  %605 = vmatprep.subr.bf16.mxu0 %v564
  %606 = vmatpush1.bf16.msra.mxu0 %v563
  %607 = vmatprep.subr.bf16.mxu0 %v567
  %608 = vmatpush1.bf16.msra.mxu0 %v566
  %609 = vmatprep.subr.bf16.mxu0 0
  %610 = vmatpush1.bf16.msra.mxu0 0
  %611 = vmatprep.subr.bf16.mxu0 0
  %612 = vmatpush1.bf16.msra.mxu0 0
  %613 = vmatprep.subr.bf16.mxu0 0
  %614 = vmatpush1.bf16.msra.mxu0 0
  %615 = vmatprep.subr.bf16.mxu0 0
  %616 = vmatpush1.bf16.msra.mxu0 0
  %617 = vmatprep.subr.bf16.mxu0 0
  %618 = vmatpush1.bf16.msra.mxu0 0
  %619 = vmatprep.subr.bf16.mxu0 0
  %620 = vmatpush1.bf16.msra.mxu0 0
  %621 = vmatprep.subr.bf16.mxu0 0
  %622 = vmatpush1.bf16.msra.mxu0 0
  %623 = vmatprep.subr.bf16.mxu0 0
  %624 = vmatpush1.bf16.msra.mxu0 0
  %625 = vmatprep.mubr.bf16.mxu0 0
  %626 = vmatmul.mubr.bf16.gmra.mrb[0].mxu0 %v415
  %v627 = vpop.f32.mrb[0].mxu0
  %v628 = vadd.f32 %v453, %v627
  %v629 = vpop.f32.mrb[0].mxu0
  %v630 = vadd.f32 %v457, %v629
  %v631 = vpop.f32.mrb[0].mxu0
  %v632 = vpop.f32.mrb[0].mxu0
  %633 = vdwg.mxu0
  %634 = vmatprep.subr.bf16.mxu0 0
  %635 = vmatpush1.bf16.msra.mxu0 %v547
  %636 = vmatprep.subr.bf16.mxu0 0
  %637 = vmatpush1.bf16.msra.mxu0 %v550
  %638 = vmatprep.subr.bf16.mxu0 0
  %639 = vmatpush1.bf16.msra.mxu0 %v553
  %640 = vmatprep.subr.bf16.mxu0 0
  %641 = vmatpush1.bf16.msra.mxu0 %v556
  %642 = vmatprep.subr.bf16.mxu0 0
  %643 = vmatpush1.bf16.msra.mxu0 %v559
  %644 = vmatprep.subr.bf16.mxu0 0
  %645 = vmatpush1.bf16.msra.mxu0 %v562
  %646 = vmatprep.subr.bf16.mxu0 0
  %647 = vmatpush1.bf16.msra.mxu0 %v565
  %648 = vmatprep.subr.bf16.mxu0 0
  %649 = vmatpush1.bf16.msra.mxu0 %v568
  %650 = vmatprep.subr.bf16.mxu0 0
  %651 = vmatpush1.bf16.msra.mxu0 0
  %652 = vmatprep.subr.bf16.mxu0 0
  %653 = vmatpush1.bf16.msra.mxu0 0
  %654 = vmatprep.subr.bf16.mxu0 0
  %655 = vmatpush1.bf16.msra.mxu0 0
  %656 = vmatprep.subr.bf16.mxu0 0
  %657 = vmatpush1.bf16.msra.mxu0 0
  %658 = vmatprep.subr.bf16.mxu0 0
  %659 = vmatpush1.bf16.msra.mxu0 0
  %660 = vmatprep.subr.bf16.mxu0 0
  %661 = vmatpush1.bf16.msra.mxu0 0
  %662 = vmatprep.subr.bf16.mxu0 0
  %663 = vmatpush1.bf16.msra.mxu0 0
  %664 = vmatprep.subr.bf16.mxu0 0
  %665 = vmatpush1.bf16.msra.mxu0 0
  %666 = vmatprep.mubr.bf16.mxu0 0
  %667 = vmatmul.mubr.bf16.gmra.mrb[0].mxu0 %v415
  %v668 = vpop.f32.mrb[0].mxu0
  %v669 = vadd.f32 %v461, %v668
  %v670 = vpop.f32.mrb[0].mxu0
  %v671 = vpop.f32.mrb[0].mxu0
  %v672 = vpop.f32.mrb[0].mxu0
  %673 = vdwg.mxu0
  %v674 = vadd.f32 %v628, %v255
  %v675 = vxor.u32 %v674, 2147483648
  %v676 = vmul.f32 %v675, 1.442695
  %v677 = vpow.pop %v676
  %v678 = vadd.f32 %v677, 1.0
  %v679 = vrcp.pop %v678
  %v680 = vmul.f32 1.0, %v679
  %v681 = vadd.f32 %v630, %v257
  %v682 = vxor.u32 %v681, 2147483648
  %v683 = vmul.f32 %v682, 1.442695
  %v684 = vpow.pop %v683
  %v685 = vadd.f32 %v684, 1.0
  %v686 = vrcp.pop %v685
  %v687 = vmul.f32 1.0, %v686
  %v688 = vmul.f32 %v680, %v296
  %v689 = vadd.f32 %v669, %v688
  %v690 = vtanh.pop %v689
  %v691 = vsub.f32 1.0, %v687
  %v692 = vmul.f32 %v691, %v690
  %v693 = vmul.f32 %v687, %v41
  %v694 = vadd.f32 %v692, %v693
  %v695 = vpack.c.bf16 %v694, %v694
  %v696 = vld [vmem:[%s7] sm:$0xf]
  %v697 = vld [vmem:[%s7 + $0x4] sm:$0xf]
  %v698 = vld [vmem:[%s7 + $0x8] sm:$0xf]
  %v699 = vld [vmem:[%s7 + $0xc] sm:$0xf]
  %v700 = vld [vmem:[%s7 + $0x10] sm:$0xf]
  %v701 = vld [vmem:[%s7 + $0x14] sm:$0xf]
  %v702 = vld [vmem:[%s7 + $0x18] sm:$0xf]
  %v703 = vld [vmem:[%s7 + $0x1c] sm:$0xf]
  %v704 = vld [vmem:[%s7 + $0x20] sm:$0xf]
  %v705 = vld [vmem:[%s7 + $0x24] sm:$0xf]
  %v706 = vld [vmem:[%s7 + $0x28] sm:$0xf]
  %v707 = vld [vmem:[%s7 + $0x2c] sm:$0xf]
  %v708 = vld [vmem:[%s7 + $0x30] sm:$0xf]
  %v709 = vld [vmem:[%s7 + $0x34] sm:$0xf]
  %v710 = vld [vmem:[%s7 + $0x38] sm:$0xf]
  %v711 = vld [vmem:[%s7 + $0x3c] sm:$0xf]
  %v712 = vld [vmem:[%s8] sm:$0x1]
  %v714 = vlaneseq
  %v715 = vshrl.u32 %v714, 7
  %v716 = vsub.s32 0, %v715
  %v717 = vrot.slane %v712, %v716
  %v735 = vunpack.c.l.b16 %v696
  %v736 = vunpack.c.l.b16 %v697
  %v737 = vunpack.c.l.b16 %v698
  %v738 = vunpack.c.l.b16 %v699
  %v739 = vunpack.c.l.b16 %v700
  %v740 = vunpack.c.l.b16 %v701
  %v741 = vunpack.c.l.b16 %v702
  %v742 = vunpack.c.l.b16 %v703
  %v743 = vunpack.c.l.b16 %v704
  %v744 = vunpack.c.l.b16 %v705
  %v745 = vunpack.c.l.b16 %v706
  %v746 = vunpack.c.l.b16 %v707
  %v747 = vunpack.c.l.b16 %v708
  %v748 = vunpack.c.l.b16 %v709
  %v749 = vunpack.c.l.b16 %v710
  %v750 = vunpack.c.l.b16 %v711
  %v751 = vpack.c.b16 %v736, %v735
  %v752 = vpack.c.b16 %v738, %v737
  %v753 = vpack.c.b16 %v740, %v739
  %v754 = vpack.c.b16 %v742, %v741
  %v755 = vpack.c.b16 %v744, %v743
  %v756 = vpack.c.b16 %v746, %v745
  %v757 = vpack.c.b16 %v748, %v747
  %v758 = vpack.c.b16 %v750, %v749
  %767 = vmatprep.subr.bf16.mxu0 0
  %768 = vmatpush1.bf16.msra.mxu0 %v751
  %769 = vmatprep.subr.bf16.mxu0 0
  %770 = vmatpush1.bf16.msra.mxu0 %v752
  %771 = vmatprep.subr.bf16.mxu0 0
  %772 = vmatpush1.bf16.msra.mxu0 %v753
  %773 = vmatprep.subr.bf16.mxu0 0
  %774 = vmatpush1.bf16.msra.mxu0 %v754
  %775 = vmatprep.subr.bf16.mxu0 0
  %776 = vmatpush1.bf16.msra.mxu0 %v755
  %777 = vmatprep.subr.bf16.mxu0 0
  %778 = vmatpush1.bf16.msra.mxu0 %v756
  %779 = vmatprep.subr.bf16.mxu0 0
  %780 = vmatpush1.bf16.msra.mxu0 %v757
  %781 = vmatprep.subr.bf16.mxu0 0
  %782 = vmatpush1.bf16.msra.mxu0 %v758
  %783 = vmatprep.subr.bf16.mxu0 0
  %784 = vmatpush1.bf16.msra.mxu0 0
  %785 = vmatprep.subr.bf16.mxu0 0
  %786 = vmatpush1.bf16.msra.mxu0 0
  %787 = vmatprep.subr.bf16.mxu0 0
  %788 = vmatpush1.bf16.msra.mxu0 0
  %789 = vmatprep.subr.bf16.mxu0 0
  %790 = vmatpush1.bf16.msra.mxu0 0
  %791 = vmatprep.subr.bf16.mxu0 0
  %792 = vmatpush1.bf16.msra.mxu0 0
  %793 = vmatprep.subr.bf16.mxu0 0
  %794 = vmatpush1.bf16.msra.mxu0 0
  %795 = vmatprep.subr.bf16.mxu0 0
  %796 = vmatpush1.bf16.msra.mxu0 0
  %797 = vmatprep.subr.bf16.mxu0 0
  %798 = vmatpush1.bf16.msra.mxu0 0
  %799 = vmatprep.mubr.bf16.mxu0 0
  %800 = vmatmul.mubr.bf16.gmra.mrb[0].mxu0 %v695
  %v801 = vpop.f32.mrb[0].mxu0
  %v802 = vadd.f32 %v717, %v801
  %v803 = vpop.f32.mrb[0].mxu0
  %v804 = vpop.f32.mrb[0].mxu0
  %v805 = vpop.f32.mrb[0].mxu0
  %806 = vdwg.mxu0
  %807 = vmax.xlane.f32.xlu0 %v802
  %v808 = vpop.xlane.xlu0 %807
  %v809 = vsub.f32 %v802, %v808
  %v810 = vmul.f32 %v809, 1.442695
  %v811 = vpow.pop %v810
  %812 = vadd.xlane.f32.xlu0 %v811
  %v813 = vpop.xlane.xlu0 %812
  %v814 = vlog2.pop %v813
  %v815 = vmul.f32 %v814, 0.6931472
  %v816 = vsub.f32 %v809, %v815
  %817 = vst [vmem:[%s9] sm:$0xff] %v816
  %818 = vst [vmem:[#allocation2] sm:$0xff] %v694
  %819 = vst [vmem:[%s10] sm:$0xff] %v694
  // Predicated region
  $region42: #{decoder_forward.1} parent=0 // pred_check
    _
  $region43: #{decoder_forward.1} parent=0 // pred_check_branch
    %821 = sbr.rel (0) target = $region45
  $region44: #{decoder_forward.1} parent=0 // pred_region
    _
  $region45: #{decoder_forward.1} parent=0 // pred_fallthru
    _
  // Predicated region
  $region46: #{decoder_forward.1} parent=0 // pred_check
    _
  $region47: #{decoder_forward.1} parent=0 // pred_check_branch
    %823 = sbr.rel (0) target = $region49
  $region48: #{decoder_forward.1} parent=0 // pred_region
    _
  $region49: #{decoder_forward.1} parent=0 // pred_fallthru
    _
  // Predicated region
  $region50: #{decoder_forward.1} parent=0 // pred_check
    _
  $region51: #{decoder_forward.1} parent=0 // pred_check_branch
    %825 = sbr.rel (0) target = $region53
  $region52: #{decoder_forward.1} parent=0 // pred_region
    _
  $region53: #{decoder_forward.1} parent=0 // pred_fallthru
    _
  // Predicated region
  $region54: #{decoder_forward.1} parent=0 // pred_check
    _
  $region55: #{decoder_forward.1} parent=0 // pred_check_branch
    %827 = sbr.rel (0) target = $region57
  $region56: #{decoder_forward.1} parent=0 // pred_region
    _
  $region57: #{decoder_forward.1} parent=0 // pred_fallthru
    _

</llo_original>
